<compile_context>
chip_gen: v6e
topology: v6e:2x2x1
jax: 0.10.0
libtpu: 0.0.40
codegen_flags: <defaults>
</compile_context>

<pallas_src>
import functools
from math import pi as PI  # noqa: F401  (kept for parity with the reference module)

import jax
import jax.numpy as jnp
from jax import lax
from jax.experimental import pallas as pl
from jax.experimental.pallas import tpu as pltpu


def _round_up(x, m):
    return (x + m - 1) // m * m


def _gaussian_smearing_kernel(dist_ref, out_ref, *, coeff, start, step,
                              num_gaussians, g_pad):
    # dist_ref: (1, BN)  distances, lane-dense (edge index on the lane axis)
    # out_ref : (BN, G)  output tile in the PyTorch (num_edges, num_gaussians) layout
    d = dist_ref[...]                                                # (1, BN)

    # Gaussian centers generated in-kernel: offset[g] = start + g*step.
    g = lax.broadcasted_iota(jnp.int32, (g_pad, 1), 0).astype(jnp.float32)
    off = start + step * g                                           # (G_pad, 1)

    diff = d - off                                                   # (G_pad, BN)
    val = jnp.exp(coeff * (diff * diff))                             # EUP, full-width lanes

    # XLU transpose back to output layout, drop the sublane padding, store.
    val_t = jnp.transpose(val, (1, 0))                               # (BN, G_pad)
    out_ref[...] = val_t[:, :num_gaussians].astype(out_ref.dtype)


def gaussian_smearing(dist, *, start=0.0, stop=5.0, num_gaussians=50,
                      block_n=1024, out_dtype=jnp.float32):
    """dist: (N,) distances -> (N, num_gaussians) gaussian-smeared features.

    block_n is the row tile (sweep 1024-4096 for large N); it is rounded to a
    multiple of 128 so the lane-dense internal layout stays vreg-aligned.
    """
    dist = jnp.asarray(dist, jnp.float32).reshape(-1)
    N = dist.shape[0]
    G = int(num_gaussians)
    assert G >= 2, "need at least two gaussian centers"

    step = (float(stop) - float(start)) / (G - 1)
    coeff = -0.5 / step ** 2

    if N == 0:
        return jnp.zeros((0, G), out_dtype)

    g_pad = _round_up(G, 8)                      # sublane-aligned center count
    bn = _round_up(max(1, min(int(block_n), N)), 128)
    grid_n = pl.cdiv(N, bn)
    n_pad = grid_n * bn

    # Pad the (tiny) distance vector so input blocks are always fully valid;
    # the ragged last *output* block is masked by Pallas on writeback.
    dist_padded = jnp.pad(dist, (0, n_pad - N)).reshape(1, n_pad)

    kernel = functools.partial(
        _gaussian_smearing_kernel,
        coeff=float(coeff), start=float(start), step=float(step),
        num_gaussians=G, g_pad=g_pad)

    return pl.pallas_call(
        kernel,
        out_shape=jax.ShapeDtypeStruct((N, G), out_dtype),
        grid=(grid_n,),
        in_specs=[
            pl.BlockSpec((1, bn), lambda i: (0, i)),      # dist tile (lane-dense)
        ],
        out_specs=pl.BlockSpec((bn, G), lambda i: (i, 0)),
        compiler_params=pltpu.CompilerParams(
            dimension_semantics=("parallel",),            # v7x: split blocks over 2 TCs
        ),
    )(dist_padded)


class GaussianSmearingJAX:
    """Parameter setup mirroring the PyTorch module __init__ (deterministic)."""

    def __init__(self, start=0.0, stop=5.0, num_gaussians=50,
                 block_n=1024, out_dtype=jnp.float32):
        assert num_gaussians >= 2, "need at least two gaussian centers"
        self.start = float(start)
        self.stop = float(stop)
        self.num_gaussians = int(num_gaussians)
        self.step = (self.stop - self.start) / (self.num_gaussians - 1)
        self.coeff = -0.5 / self.step ** 2
        # Buffer kept for parity with the torch module (offset[g] = start + g*step
        # is exactly linspace(start, stop, num_gaussians)).
        self.offset = (self.start
                       + self.step * jnp.arange(self.num_gaussians, dtype=jnp.float32))
        self.block_n = block_n
        self.out_dtype = out_dtype

    def __call__(self, dist):
        return gaussian_smearing(
            dist, start=self.start, stop=self.stop,
            num_gaussians=self.num_gaussians,
            block_n=self.block_n, out_dtype=self.out_dtype)


if __name__ == "__main__":
    num_gaussians = 50

    def reference(module, dist):
        d = dist.reshape(-1, 1) - module.offset.reshape(1, -1)
        return jnp.exp(module.coeff * (d * d))

    # Case 1: ragged edge count + multi-block grid (exercises last-block masking).
    n_edges = 200
    dist = jax.random.uniform(jax.random.PRNGKey(0), (n_edges,), jnp.float32, 0.0, 5.0)
    module = GaussianSmearingJAX(0.0, 5.0, num_gaussians, block_n=128)
    out = jax.block_until_ready(module(dist))
    assert out.shape == (n_edges, num_gaussians)
    assert jnp.allclose(out, reference(module, dist), atol=1e-6, rtol=1e-6)

    # Case 2: default (large) block size.
    n_edges2 = 1024
    dist2 = jax.random.uniform(jax.random.PRNGKey(0), (n_edges2,), jnp.float32, 0.0, 5.0)
    module2 = GaussianSmearingJAX(0.0, 5.0, num_gaussians)   # block_n=1024
    out2 = jax.block_until_ready(module2(dist2))
    assert out2.shape == (n_edges2, num_gaussians)
    assert jnp.allclose(out2, reference(module2, dist2), atol=1e-6, rtol=1e-6)

    # TODO(synk): on v6e/v7x, pass out_dtype=jnp.bfloat16 if the consumer tolerates
    # bf16 to halve HBM writeback (kept f32 here to match torch semantics / v5e).
    print("KERNEL_OK")
</pallas_src>

<mosaic_0001>
module attributes {stable_mosaic.version = 11 : i64} {
  func.func @_gaussian_smearing_kernel(%arg0: i32, %arg1: memref<1x128xf32, #tpu.memory_space<vmem>>, %arg2: memref<128x50xf32, #tpu.memory_space<vmem>>) attributes {dimension_semantics = [#tpu.dimension_semantics<parallel>], iteration_bounds = array<i64: 2>, scalar_prefetch = 0 : i64, scratch_operands = 0 : i64, tpu.core_type = #tpu.core_type<tc>, window_params = [{transform_indices = @transform_0, window_bounds = array<i64: 1, 128>}, {transform_indices = @transform_1, window_bounds = array<i64: 128, 50>}]} {
    %c0 = arith.constant 0 : index
    %c0_0 = arith.constant 0 : index
    %0 = vector.load %arg1[%c0, %c0_0] : memref<1x128xf32, #tpu.memory_space<vmem>>, vector<1x128xf32>
    %1 = tpu.iota {dimensions = array<i32: 0>} : vector<56x1xi32>
    %2 = arith.sitofp %1 : vector<56x1xi32> to vector<56x1xf32>
    %cst = arith.constant 0.10204082 : f32
    %3 = vector.broadcast %cst : f32 to vector<56x1xf32>
    %4 = arith.mulf %3, %2 : vector<56x1xf32>
    %cst_1 = arith.constant 0.000000e+00 : f32
    %5 = vector.broadcast %cst_1 : f32 to vector<56x1xf32>
    %6 = arith.addf %5, %4 : vector<56x1xf32>
    %7 = vector.broadcast %0 : vector<1x128xf32> to vector<56x128xf32>
    %8 = vector.broadcast %6 : vector<56x1xf32> to vector<56x128xf32>
    %9 = arith.subf %7, %8 : vector<56x128xf32>
    %10 = arith.mulf %9, %9 : vector<56x128xf32>
    %cst_2 = arith.constant -4.802000e+01 : f32
    %11 = vector.broadcast %cst_2 : f32 to vector<56x128xf32>
    %12 = arith.mulf %11, %10 : vector<56x128xf32>
    %13 = math.exp %12 : vector<56x128xf32>
    %14 = tpu.transpose %13, [1, 0] : vector<56x128xf32> -> vector<128x56xf32>
    %15 = vector.extract_strided_slice %14 {offsets = [0, 0], sizes = [128, 50], strides = [1, 1]} : vector<128x56xf32> to vector<128x50xf32>
    %c0_3 = arith.constant 0 : index
    %c0_4 = arith.constant 0 : index
    %16 = vector.load %arg2[%c0_3, %c0_4] : memref<128x50xf32, #tpu.memory_space<vmem>>, vector<128x50xf32>
    tpu.vector_store %arg2[%c0_3, %c0_4], %15 {strides = array<i32>} : memref<128x50xf32, #tpu.memory_space<vmem>>, vector<128x50xf32>,
    return
  }
  func.func @transform_0(%arg0: i32) -> (i32, i32) {
    %c0_i32 = arith.constant 0 : i32
    %c0_i32_0 = arith.constant 0 : i32
    return %c0_i32, %arg0 : i32, i32
  }
  func.func @transform_1(%arg0: i32) -> (i32, i32) {
    %c0_i32 = arith.constant 0 : i32
    %c0_i32_0 = arith.constant 0 : i32
    return %arg0, %c0_i32 : i32, i32
  }
}

</mosaic_0001>

<llo_original>
// kernel: tpu_custom_call.1
$region0: #{tpu_custom_call.1}
  #allocation0 [shape = 'u32[]', space=smem, size = 0x4, offset = 0x4, fixed_abs, tag = 'smem constant byte address 0x4 - core index']
  #allocation1 [shape = 'u32[144,128]{1,0:T(1,128)}', space=vmem, size = 0x12000, scoped, tag = 'internal scratch']
  %s0 = inlined_call_operand.hbm [shape: f32[1,256], index: 0, kind: input, shape index: {}]
  %s1 = inlined_call_operand.vmem [shape: f32[200,50], index: 1, kind: output, shape index: {}]
  %s2 = sld [smem:[#allocation0]]
  $region89: #{tpu_custom_call.1} parent=0
    _
  %s4 = ssub.s32 1, %s2
  %s5 = scalar_select 0, %s4, %s2
  $region1: #{tpu_custom_call.1} parent=0
    #allocation2 [shape = 'u8[1024]{0}', space=vmem, size = 0x400, scoped, tag = 'input window, operand 0']
    #allocation3 [shape = 's32[2]{0}', space=sflag, size = 0x8, scoped, tag = 'scoped memory for tpu_custom_call.1']
    #allocation4 [shape = 'u8[131072]{0}', space=vmem, size = 0x20000, scoped, tag = 'output window, operand 0']
    %6 = vsyncpa [#allocation3], 0
    %s7 = scalar_lea.sflag [#allocation3], 1
    %8 = vsyncpa %s7, 0
    loop: start=0, step=1, limit=4
    $region2: #{tpu_custom_call.1} parent=1 // loop_pre_header
      _
    $region3: #{tpu_custom_call.1} parent=1 // loop_header
      %s10 = sphi 0, %s14
      %p11 = scmp.ge.s32.totalorder %s10, 4
      %s20 = sphi 0, %s22
      %s23 = sphi 0, %s20
      %s24 = sphi 0, %s23
      %s40 = sphi 0, %s24
      %s46 = sphi 0, %s48
      %s49 = sphi 0, %s46
      %s50 = sphi 0, %s49
      %s66 = sphi 0, %s50
    $region4: #{tpu_custom_call.1} parent=1 // loop_header_branch
      %13 = sbr.rel (%p11) target = $region8
    $region5: #{tpu_custom_call.1} parent=1 // loop_body
      %s15 = ssub.s32 %s10, 1
      %s16 = ssub.s32 %s10, 2
      %s17 = sadd.s32 %s10, 1
      %s18 = ssub.s32 %s10, %s17
      %p19 = scmp.eq.s32.totalorder %s18, 0
      %s21 = sadd.s32 %s20, 1
      %s22 = scalar_select %p19, %s20, %s21
      %p25 = pneg %p19
      %p26 = scmp.eq.s32.totalorder %s10, 1
      %p27 = por %p25, %p26
      %p28 = scmp.ne.s32.totalorder %s20, %s23
      %p29 = scmp.eq.s32.totalorder %s10, 0
      %p30 = por %p28, %p29
      %p31 = scmp.ne.s32.totalorder %s20, %s23
      %p32 = scmp.eq.s32.totalorder %s15, 1
      %p33 = por %p31, %p32
      %p34 = scmp.ne.s32.totalorder %s23, %s24
      %p35 = scmp.eq.s32.totalorder %s15, 0
      %p36 = por %p34, %p35
      %p37 = scmp.ne.s32.totalorder %s23, %s24
      %p38 = scmp.eq.s32.totalorder %s16, 1
      %p39 = por %p37, %p38
      %p41 = scmp.ne.s32.totalorder %s24, %s40
      %p42 = scmp.eq.s32.totalorder %s16, 0
      %p43 = por %p41, %p42
      %s44 = ssub.s32 %s10, %s17
      %p45 = scmp.eq.s32.totalorder %s44, 0
      %s47 = sadd.s32 %s46, 1
      %s48 = scalar_select %p45, %s46, %s47
      %p51 = pneg %p45
      %p52 = scmp.eq.s32.totalorder %s10, 1
      %p53 = por %p51, %p52
      %p54 = scmp.ne.s32.totalorder %s46, %s49
      %p55 = scmp.eq.s32.totalorder %s10, 0
      %p56 = por %p54, %p55
      %p57 = scmp.ne.s32.totalorder %s46, %s49
      %p58 = scmp.eq.s32.totalorder %s15, 1
      %p59 = por %p57, %p58
      %p60 = scmp.ne.s32.totalorder %s49, %s50
      %p61 = scmp.eq.s32.totalorder %s15, 0
      %p62 = por %p60, %p61
      %p63 = scmp.ne.s32.totalorder %s49, %s50
      %p64 = scmp.eq.s32.totalorder %s16, 1
      %p65 = por %p63, %p64
      %p67 = scmp.ne.s32.totalorder %s50, %s66
      %p68 = scmp.eq.s32.totalorder %s16, 0
      %p69 = por %p67, %p68
      %p70 = scmp.le.s32.totalorder 1, %s10
      %p71 = scmp.lt.s32.totalorder %s10, 3
      %p72 = pnand %p70, %p71
      %p73 = pneg %p72
      // Predicated region
      $region9: #{tpu_custom_call.1} parent=5 // pred_check
        _
      $region10: #{tpu_custom_call.1} parent=5 // pred_check_branch
        %75 = sbr.rel (%p72) target = $region12
      $region11: #{tpu_custom_call.1} parent=5 // pred_region
        %s76 = ssub.s32 %s10, 1
      $region12: #{tpu_custom_call.1} parent=5 // pred_fallthru
        _
      %p77 = scmp.lt.s32.totalorder %s10, 2
      // Predicated region
      $region13: #{tpu_custom_call.1} parent=5 // pred_check
        %p78 = pneg %p77
      $region14: #{tpu_custom_call.1} parent=5 // pred_check_branch
        %80 = sbr.rel (%p78) target = $region16
      $region15: #{tpu_custom_call.1} parent=5 // pred_region
        // Predicated region
        $region17: #{tpu_custom_call.1} parent=15 // pred_check
          %p81 = pneg %p30
        $region18: #{tpu_custom_call.1} parent=15 // pred_check_branch
          %83 = sbr.rel (%p81) target = $region20
        $region19: #{tpu_custom_call.1} parent=15 // pred_region
          %s84 = sand.u32 %s20, 1
          %s85 = scalar_lea.sflag [#allocation3], %s84
          %s86 = sand.u32 %s20, 1
          %s87 = scalar_lea.vmem [#allocation2], %s86
          %s89 = ssub.s32 16, 16
          %90 = vsyncadd %s85, %s89
          %s91 = smul.addr %s10, 16
          %s92 = scalar_lea.hbm %s0, %s91
          %s94 = sshll.u32 %s87, 4
          %s95 = int_to_ptr.vmem [resolvable:$true] %s94
          %97 = dma.hbm_to_vmem [thread:$0]  %s92, 16, %s95, %s85
        $region20: #{tpu_custom_call.1} parent=15 // pred_fallthru
          _
      $region16: #{tpu_custom_call.1} parent=5 // pred_fallthru
        _
      %p98 = scmp.le.s32.totalorder 1, %s10
      %p99 = scmp.lt.s32.totalorder %s10, 3
      %p100 = pnand %p98, %p99
      %p101 = pneg %p100
      // Predicated region
      $region21: #{tpu_custom_call.1} parent=5 // pred_check
        _
      $region22: #{tpu_custom_call.1} parent=5 // pred_check_branch
        %103 = sbr.rel (%p100) target = $region24
      $region23: #{tpu_custom_call.1} parent=5 // pred_region
        %s104 = ssub.s32 %s10, 1
        %s105 = sand.u32 %s23, 1
        %s106 = scalar_lea.sflag [#allocation3], %s105
        %s107 = sand.u32 %s23, 1
        %s108 = scalar_lea.vmem [#allocation2], %s107
        // Predicated region
        $region25: #{tpu_custom_call.1} parent=23 // pred_check
          %p109 = pneg %p36
        $region26: #{tpu_custom_call.1} parent=23 // pred_check_branch
          %111 = sbr.rel (%p109) target = $region28
        $region27: #{tpu_custom_call.1} parent=23 // pred_region
          %112 = dma.done %s106, 16
        $region28: #{tpu_custom_call.1} parent=23 // pred_fallthru
          _
        %s113 = sand.u32 %s23, 1
        %s114 = scalar_lea.sflag [#allocation3], %s113
        %s115 = sand.u32 %s23, 1
        %s116 = scalar_lea.vmem [#allocation2], %s115
        %p117 = pneg %p36
        %p118 = pneg %p33
        %p119 = pneg %p62
        %p120 = pneg %p59
        %s121 = sand.u32 %s49, 1
        %s122 = sand.u32 %s49, 1
        %s123 = smul.addr %s122, 128
        %s124 = scalar_lea.vmem [#allocation4], %s123
        %s125 = smul.u32 16, %s15
        %s126 = ssub.s32 25, %s125
        %p127 = scmp.lt.s32.totalorder %s126, 16
        %s128 = scalar_select %p127, %s126, 16
        %s129 = smul.u32 128, %s128
        %v130 = vld [vmem:[%s108] sm:$0x1]
        %v131 = vlaneseq
        %v132 = vshrl.u32 %v131, 7
        %v133 = vadd.s32 %v132, 8
        %v134 = vadd.s32 %v132, 16
        %v135 = vadd.s32 %v132, 24
        %v136 = vadd.s32 %v132, 32
        %v137 = vadd.s32 %v132, 40
        %v138 = vadd.s32 %v132, 48
        %v139 = vcvt.s32.f32 %v132
        %v140 = vcvt.s32.f32 %v133
        %v141 = vcvt.s32.f32 %v134
        %v142 = vcvt.s32.f32 %v135
        %v143 = vcvt.s32.f32 %v136
        %v144 = vcvt.s32.f32 %v137
        %v145 = vcvt.s32.f32 %v138
        %v146 = vmul.f32 %v139, 0.10204082
        %v147 = vmul.f32 %v140, 0.10204082
        %v148 = vmul.f32 %v141, 0.10204082
        %v149 = vmul.f32 %v142, 0.10204082
        %v150 = vmul.f32 %v143, 0.10204082
        %v151 = vmul.f32 %v144, 0.10204082
        %v152 = vmul.f32 %v145, 0.10204082
        %v153 = vadd.f32 %v146, 0.0
        %v154 = vadd.f32 %v147, 0.0
        %v155 = vadd.f32 %v148, 0.0
        %v156 = vadd.f32 %v149, 0.0
        %v157 = vadd.f32 %v150, 0.0
        %v158 = vadd.f32 %v151, 0.0
        %v159 = vadd.f32 %v152, 0.0
        %v161 = vlaneseq
        %v162 = vshrl.u32 %v161, 7
        %v163 = vsub.s32 0, %v162
        %v164 = vrot.slane %v130, %v163
        %v166 = vsub.f32 %v164, %v153
        %v167 = vsub.f32 %v164, %v154
        %v168 = vsub.f32 %v164, %v155
        %v169 = vsub.f32 %v164, %v156
        %v170 = vsub.f32 %v164, %v157
        %v171 = vsub.f32 %v164, %v158
        %v172 = vsub.f32 %v164, %v159
        %v173 = vmul.f32 %v166, %v166
        %v174 = vmul.f32 %v167, %v167
        %v175 = vmul.f32 %v168, %v168
        %v176 = vmul.f32 %v169, %v169
        %v177 = vmul.f32 %v170, %v170
        %v178 = vmul.f32 %v171, %v171
        %v179 = vmul.f32 %v172, %v172
        %v180 = vmul.f32 %v173, -48.02
        %v181 = vmul.f32 %v174, -48.02
        %v182 = vmul.f32 %v175, -48.02
        %v183 = vmul.f32 %v176, -48.02
        %v184 = vmul.f32 %v177, -48.02
        %v185 = vmul.f32 %v178, -48.02
        %v186 = vmul.f32 %v179, -48.02
        %v187 = vmul.f32 %v180, 1.442695
        %v188 = vpow.pop %v187
        %v189 = vmul.f32 %v181, 1.442695
        %v190 = vpow.pop %v189
        %v191 = vmul.f32 %v182, 1.442695
        %v192 = vpow.pop %v191
        %v193 = vmul.f32 %v183, 1.442695
        %v194 = vpow.pop %v193
        %v195 = vmul.f32 %v184, 1.442695
        %v196 = vpow.pop %v195
        %v197 = vmul.f32 %v185, 1.442695
        %v198 = vpow.pop %v197
        %v199 = vmul.f32 %v186, 1.442695
        %v200 = vpow.pop %v199
        %201 = vxpose.xlu0.b32.start [1/16] %v188, 128
        %202 = vxpose.xlu0.b32.cont [2/16] %v190, 128
        %203 = vxpose.xlu0.b32.cont [3/16] %v192, 128
        %204 = vxpose.xlu0.b32.cont [4/16] %v194, 128
        %205 = vxpose.xlu0.b32.cont [5/16] %v196, 128
        %206 = vxpose.xlu0.b32.cont [6/16] %v198, 128
        %207 = vxpose.xlu0.b32.cont [7/16] %v200, 128
        %208 = vxpose.xlu0.b32.cont [8/16] 0.0, 128
        %209 = vxpose.xlu0.b32.cont [9/16] 0.0, 128
        %210 = vxpose.xlu0.b32.cont [10/16] 0.0, 128
        %211 = vxpose.xlu0.b32.cont [11/16] 0.0, 128
        %212 = vxpose.xlu0.b32.cont [12/16] 0.0, 128
        %213 = vxpose.xlu0.b32.cont [13/16] 0.0, 128
        %214 = vxpose.xlu0.b32.cont [14/16] 0.0, 128
        %215 = vxpose.xlu0.b32.cont [15/16] 0.0, 128
        %216 = vxpose.xlu0.b32.end [16/16] 0.0, 128
        %v217 = vpop.trf.xlu0
        %v218 = vpop.trf.xlu0
        %v219 = vpop.trf.xlu0
        %v220 = vpop.trf.xlu0
        %v221 = vpop.trf.xlu0
        %v222 = vpop.trf.xlu0
        %v223 = vpop.trf.xlu0
        %v224 = vpop.trf.xlu0
        %v225 = vpop.trf.xlu0
        %v226 = vpop.trf.xlu0
        %v227 = vpop.trf.xlu0
        %v228 = vpop.trf.xlu0
        %v229 = vpop.trf.xlu0
        %v230 = vpop.trf.xlu0
        %v231 = vpop.trf.xlu0
        %v232 = vpop.trf.xlu0
        %vm233 = vcmask 408576
        %234 = vst.msk [vmem:[%s124] sm:$0xff] %vm233, %v217
        %235 = vst.msk [vmem:[%s124 + $0x8] sm:$0xff] %vm233, %v218
        %236 = vst.msk [vmem:[%s124 + $0x10] sm:$0xff] %vm233, %v219
        %237 = vst.msk [vmem:[%s124 + $0x18] sm:$0xff] %vm233, %v220
        %238 = vst.msk [vmem:[%s124 + $0x20] sm:$0xff] %vm233, %v221
        %239 = vst.msk [vmem:[%s124 + $0x28] sm:$0xff] %vm233, %v222
        %240 = vst.msk [vmem:[%s124 + $0x30] sm:$0xff] %vm233, %v223
        %241 = vst.msk [vmem:[%s124 + $0x38] sm:$0xff] %vm233, %v224
        %242 = vst.msk [vmem:[%s124 + $0x40] sm:$0xff] %vm233, %v225
        %243 = vst.msk [vmem:[%s124 + $0x48] sm:$0xff] %vm233, %v226
        %244 = vst.msk [vmem:[%s124 + $0x50] sm:$0xff] %vm233, %v227
        %245 = vst.msk [vmem:[%s124 + $0x58] sm:$0xff] %vm233, %v228
        %246 = vst.msk [vmem:[%s124 + $0x60] sm:$0xff] %vm233, %v229
        %247 = vst.msk [vmem:[%s124 + $0x68] sm:$0xff] %vm233, %v230
        %248 = vst.msk [vmem:[%s124 + $0x70] sm:$0xff] %vm233, %v231
        %249 = vst.msk [vmem:[%s124 + $0x78] sm:$0xff] %vm233, %v232
        %s250 = sand.u32 %s49, 1
        %s251 = sand.u32 %s49, 1
        %s252 = smul.addr %s251, 128
        %s253 = scalar_lea.vmem [#allocation4], %s252
        // Predicated region
        $region29: #{tpu_custom_call.1} parent=23 // pred_check
          %p254 = pneg %p59
        $region30: #{tpu_custom_call.1} parent=23 // pred_check_branch
          %256 = sbr.rel (%p254) target = $region32
        $region31: #{tpu_custom_call.1} parent=23 // pred_region
          %s257 = smul.u32 16, %s15
          %s258 = ssub.s32 25, %s257
          %p259 = scmp.lt.s32.totalorder %s258, 16
          %s260 = scalar_select %p259, %s258, 16
          %s261 = smul.u32 128, %s260
          %p262 = scmp.ne.s32.totalorder 0, %s261
          %s263 = smul.addr %s257, 8
          %s264 = scalar_lea.vmem %s1, %s263
          // Predicated region
          $region33: #{tpu_custom_call.1} parent=31 // pred_check
            %p265 = pneg %p262
          $region34: #{tpu_custom_call.1} parent=31 // pred_check_branch
            %267 = sbr.rel (%p265) target = $region36
          $region35: #{tpu_custom_call.1} parent=31 // pred_region
            // Predicated region
            $region37: #{tpu_custom_call.1} parent=35 // pred_check
              _
            $region38: #{tpu_custom_call.1} parent=35 // pred_check_branch
              %269 = sbr.rel (0) target = $region40
            $region39: #{tpu_custom_call.1} parent=35 // pred_region
              // Predicated region
              $region59: #{tpu_custom_call.1} parent=39 // pred_check
                _
              $region60: #{tpu_custom_call.1} parent=39 // pred_check_branch
                %349 = sbr.rel (0) target = $region62
              $region61: #{tpu_custom_call.1} parent=39 // pred_region
                %s350 = sshrl.u32 %s260, 4
                // While loop
                $region63: #{tpu_custom_call.1} parent=61 // loop_pre_header
                  _
                $region64: #{tpu_custom_call.1} parent=61 // loop_header
                  %s352 = sphi 0, %s354
                  %p353 = scmp.ge.s32.totalorder %s352, %s350
                  %s357 = sphi 0, %s394
                  %s358 = sphi %s253, %s397
                  %s359 = sphi %s264, %s398
                $region65: #{tpu_custom_call.1} parent=61 // loop_header_branch
                  %356 = sbr.rel (%p353) target = $region69
                $region66: #{tpu_custom_call.1} parent=61 // loop_body
                  %v360 = vld [vmem:[%s358] sm:$0xff]
                  %361 = vst [vmem:[%s359] sm:$0xff] %v360
                  %v362 = vld [vmem:[%s358 + $0x8] sm:$0xff]
                  %363 = vst [vmem:[%s359 + $0x8] sm:$0xff] %v362
                  %v364 = vld [vmem:[%s358 + $0x10] sm:$0xff]
                  %365 = vst [vmem:[%s359 + $0x10] sm:$0xff] %v364
                  %v366 = vld [vmem:[%s358 + $0x18] sm:$0xff]
                  %367 = vst [vmem:[%s359 + $0x18] sm:$0xff] %v366
                  %v368 = vld [vmem:[%s358 + $0x20] sm:$0xff]
                  %369 = vst [vmem:[%s359 + $0x20] sm:$0xff] %v368
                  %v370 = vld [vmem:[%s358 + $0x28] sm:$0xff]
                  %371 = vst [vmem:[%s359 + $0x28] sm:$0xff] %v370
                  %v372 = vld [vmem:[%s358 + $0x30] sm:$0xff]
                  %373 = vst [vmem:[%s359 + $0x30] sm:$0xff] %v372
                  %v374 = vld [vmem:[%s358 + $0x38] sm:$0xff]
                  %375 = vst [vmem:[%s359 + $0x38] sm:$0xff] %v374
                  %v376 = vld [vmem:[%s358 + $0x40] sm:$0xff]
                  %377 = vst [vmem:[%s359 + $0x40] sm:$0xff] %v376
                  %v378 = vld [vmem:[%s358 + $0x48] sm:$0xff]
                  %379 = vst [vmem:[%s359 + $0x48] sm:$0xff] %v378
                  %v380 = vld [vmem:[%s358 + $0x50] sm:$0xff]
                  %381 = vst [vmem:[%s359 + $0x50] sm:$0xff] %v380
                  %v382 = vld [vmem:[%s358 + $0x58] sm:$0xff]
                  %383 = vst [vmem:[%s359 + $0x58] sm:$0xff] %v382
                  %v384 = vld [vmem:[%s358 + $0x60] sm:$0xff]
                  %385 = vst [vmem:[%s359 + $0x60] sm:$0xff] %v384
                  %v386 = vld [vmem:[%s358 + $0x68] sm:$0xff]
                  %387 = vst [vmem:[%s359 + $0x68] sm:$0xff] %v386
                  %v388 = vld [vmem:[%s358 + $0x70] sm:$0xff]
                  %389 = vst [vmem:[%s359 + $0x70] sm:$0xff] %v388
                  %v390 = vld [vmem:[%s358 + $0x78] sm:$0xff]
                  %391 = vst [vmem:[%s359 + $0x78] sm:$0xff] %v390
                  %s392 = sadd.s32 1, %s357
                  %p393 = scmp.ge.s32.totalorder %s392, %s350
                  %s394 = scalar_select %p393, 0, %s392
                  %s395 = smul.u32 %s394, 128
                  %s396 = smul.u32 %s394, 128
                  %s397 = scalar_lea.vmem %s253, %s395 [#allocation4]
                  %s398 = scalar_lea.vmem %s264, %s396
                $region67: #{tpu_custom_call.1} parent=61 // loop_footer
                  %s354 = sadd.s32 %s352, 1
                $region68: #{tpu_custom_call.1} parent=61 // loop_footer_branch
                  %351 = sbr.rel target = $region64
                $region69: #{tpu_custom_call.1} parent=61 // loop_exit
                  _
                %s399 = sshrl.u32 %s260, 4
                %s400 = sand.u32 %s260, 15
                %s401 = smul.u32 %s399, 16
                %s402 = smul.u32 8, %s401
                %s403 = scalar_lea.vmem %s253, %s402 [#allocation4]
                %s404 = smul.u32 8, %s401
                %s405 = scalar_lea.vmem %s264, %s404
                // While loop
                $region70: #{tpu_custom_call.1} parent=61 // loop_pre_header
                  _
                $region71: #{tpu_custom_call.1} parent=61 // loop_header
                  %s407 = sphi 0, %s409
                  %p408 = scmp.ge.s32.totalorder %s407, %s400
                  %s412 = sphi 0, %s419
                  %s413 = sphi %s403, %s422
                  %s414 = sphi %s405, %s423
                $region72: #{tpu_custom_call.1} parent=61 // loop_header_branch
                  %411 = sbr.rel (%p408) target = $region76
                $region73: #{tpu_custom_call.1} parent=61 // loop_body
                  %v415 = vld [vmem:[%s413] sm:$0xff]
                  %416 = vst [vmem:[%s414] sm:$0xff] %v415
                  %s417 = sadd.s32 1, %s412
                  %p418 = scmp.ge.s32.totalorder %s417, %s400
                  %s419 = scalar_select %p418, 0, %s417
                  %s420 = smul.u32 %s419, 8
                  %s421 = smul.u32 %s419, 8
                  %s422 = scalar_lea.vmem %s403, %s420 [#allocation4]
                  %s423 = scalar_lea.vmem %s405, %s421
                $region74: #{tpu_custom_call.1} parent=61 // loop_footer
                  %s409 = sadd.s32 %s407, 1
                $region75: #{tpu_custom_call.1} parent=61 // loop_footer_branch
                  %406 = sbr.rel target = $region71
                $region76: #{tpu_custom_call.1} parent=61 // loop_exit
                  _
              $region62: #{tpu_custom_call.1} parent=39 // pred_fallthru
                _
              // Predicated region
              $region77: #{tpu_custom_call.1} parent=39 // pred_check
                _
              $region78: #{tpu_custom_call.1} parent=39 // pred_check_branch
                %425 = sbr.rel target = $region80
              $region79: #{tpu_custom_call.1} parent=39 // pred_region
                _
              $region80: #{tpu_custom_call.1} parent=39 // pred_fallthru
                _
            $region40: #{tpu_custom_call.1} parent=35 // pred_fallthru
              _
            // Predicated region
            $region41: #{tpu_custom_call.1} parent=35 // pred_check
              _
            $region42: #{tpu_custom_call.1} parent=35 // pred_check_branch
              %271 = sbr.rel target = $region44
            $region43: #{tpu_custom_call.1} parent=35 // pred_region
              %s273 = ssub.s32 256, 1
              %s274 = sshrl.u32 %s260, 4
              // While loop
              $region45: #{tpu_custom_call.1} parent=43 // loop_pre_header
                _
              $region46: #{tpu_custom_call.1} parent=43 // loop_header
                %s276 = sphi 0, %s278
                %p277 = scmp.ge.s32.totalorder %s276, %s274
                %s281 = sphi 0, %s318
                %s282 = sphi %s253, %s321
                %s283 = sphi %s264, %s322
              $region47: #{tpu_custom_call.1} parent=43 // loop_header_branch
                %280 = sbr.rel (%p277) target = $region51
              $region48: #{tpu_custom_call.1} parent=43 // loop_body
                %v284 = vld [vmem:[%s282] sm:%s273]
                %285 = vst [vmem:[%s283] sm:%s273] %v284
                %v286 = vld [vmem:[%s282 + $0x8] sm:%s273]
                %287 = vst [vmem:[%s283 + $0x8] sm:%s273] %v286
                %v288 = vld [vmem:[%s282 + $0x10] sm:%s273]
                %289 = vst [vmem:[%s283 + $0x10] sm:%s273] %v288
                %v290 = vld [vmem:[%s282 + $0x18] sm:%s273]
                %291 = vst [vmem:[%s283 + $0x18] sm:%s273] %v290
                %v292 = vld [vmem:[%s282 + $0x20] sm:%s273]
                %293 = vst [vmem:[%s283 + $0x20] sm:%s273] %v292
                %v294 = vld [vmem:[%s282 + $0x28] sm:%s273]
                %295 = vst [vmem:[%s283 + $0x28] sm:%s273] %v294
                %v296 = vld [vmem:[%s282 + $0x30] sm:%s273]
                %297 = vst [vmem:[%s283 + $0x30] sm:%s273] %v296
                %v298 = vld [vmem:[%s282 + $0x38] sm:%s273]
                %299 = vst [vmem:[%s283 + $0x38] sm:%s273] %v298
                %v300 = vld [vmem:[%s282 + $0x40] sm:%s273]
                %301 = vst [vmem:[%s283 + $0x40] sm:%s273] %v300
                %v302 = vld [vmem:[%s282 + $0x48] sm:%s273]
                %303 = vst [vmem:[%s283 + $0x48] sm:%s273] %v302
                %v304 = vld [vmem:[%s282 + $0x50] sm:%s273]
                %305 = vst [vmem:[%s283 + $0x50] sm:%s273] %v304
                %v306 = vld [vmem:[%s282 + $0x58] sm:%s273]
                %307 = vst [vmem:[%s283 + $0x58] sm:%s273] %v306
                %v308 = vld [vmem:[%s282 + $0x60] sm:%s273]
                %309 = vst [vmem:[%s283 + $0x60] sm:%s273] %v308
                %v310 = vld [vmem:[%s282 + $0x68] sm:%s273]
                %311 = vst [vmem:[%s283 + $0x68] sm:%s273] %v310
                %v312 = vld [vmem:[%s282 + $0x70] sm:%s273]
                %313 = vst [vmem:[%s283 + $0x70] sm:%s273] %v312
                %v314 = vld [vmem:[%s282 + $0x78] sm:%s273]
                %315 = vst [vmem:[%s283 + $0x78] sm:%s273] %v314
                %s316 = sadd.s32 1, %s281
                %p317 = scmp.ge.s32.totalorder %s316, %s274
                %s318 = scalar_select %p317, 0, %s316
                %s319 = smul.u32 %s318, 128
                %s320 = smul.u32 %s318, 128
                %s321 = scalar_lea.vmem %s253, %s319 [#allocation4]
                %s322 = scalar_lea.vmem %s264, %s320
              $region49: #{tpu_custom_call.1} parent=43 // loop_footer
                %s278 = sadd.s32 %s276, 1
              $region50: #{tpu_custom_call.1} parent=43 // loop_footer_branch
                %275 = sbr.rel target = $region46
              $region51: #{tpu_custom_call.1} parent=43 // loop_exit
                _
              %s323 = sshrl.u32 %s260, 4
              %s324 = sand.u32 %s260, 15
              %s325 = smul.u32 %s323, 16
              %s326 = smul.u32 8, %s325
              %s327 = scalar_lea.vmem %s253, %s326 [#allocation4]
              %s328 = smul.u32 8, %s325
              %s329 = scalar_lea.vmem %s264, %s328
              // While loop
              $region52: #{tpu_custom_call.1} parent=43 // loop_pre_header
                _
              $region53: #{tpu_custom_call.1} parent=43 // loop_header
                %s331 = sphi 0, %s333
                %p332 = scmp.ge.s32.totalorder %s331, %s324
                %s336 = sphi 0, %s343
                %s337 = sphi %s327, %s346
                %s338 = sphi %s329, %s347
              $region54: #{tpu_custom_call.1} parent=43 // loop_header_branch
                %335 = sbr.rel (%p332) target = $region58
              $region55: #{tpu_custom_call.1} parent=43 // loop_body
                %v339 = vld [vmem:[%s337] sm:%s273]
                %340 = vst [vmem:[%s338] sm:%s273] %v339
                %s341 = sadd.s32 1, %s336
                %p342 = scmp.ge.s32.totalorder %s341, %s324
                %s343 = scalar_select %p342, 0, %s341
                %s344 = smul.u32 %s343, 8
                %s345 = smul.u32 %s343, 8
                %s346 = scalar_lea.vmem %s327, %s344 [#allocation4]
                %s347 = scalar_lea.vmem %s329, %s345
              $region56: #{tpu_custom_call.1} parent=43 // loop_footer
                %s333 = sadd.s32 %s331, 1
              $region57: #{tpu_custom_call.1} parent=43 // loop_footer_branch
                %330 = sbr.rel target = $region53
              $region58: #{tpu_custom_call.1} parent=43 // loop_exit
                _
            $region44: #{tpu_custom_call.1} parent=35 // pred_fallthru
              _
          $region36: #{tpu_custom_call.1} parent=31 // pred_fallthru
            _
          %426 = vnop
        $region32: #{tpu_custom_call.1} parent=23 // pred_fallthru
          _
      $region24: #{tpu_custom_call.1} parent=5 // pred_fallthru
        _
      %p427 = scmp.le.s32.totalorder 2, %s10
      // Predicated region
      $region81: #{tpu_custom_call.1} parent=5 // pred_check
        %p428 = pneg %p427
      $region82: #{tpu_custom_call.1} parent=5 // pred_check_branch
        %430 = sbr.rel (%p428) target = $region84
      $region83: #{tpu_custom_call.1} parent=5 // pred_region
        %s431 = ssub.s32 %s10, 2
        // Predicated region
        $region85: #{tpu_custom_call.1} parent=83 // pred_check
          %p432 = pneg %p65
        $region86: #{tpu_custom_call.1} parent=83 // pred_check_branch
          %434 = sbr.rel (%p432) target = $region88
        $region87: #{tpu_custom_call.1} parent=83 // pred_region
          %s435 = sand.u32 %s50, 1
          %s436 = sand.u32 %s50, 1
          %s437 = smul.addr %s436, 128
          %s438 = scalar_lea.vmem [#allocation4], %s437
        $region88: #{tpu_custom_call.1} parent=83 // pred_fallthru
          _
      $region84: #{tpu_custom_call.1} parent=5 // pred_fallthru
        _
    $region6: #{tpu_custom_call.1} parent=1 // loop_footer
      %s14 = sadd.s32 1, %s10
    $region7: #{tpu_custom_call.1} parent=1 // loop_footer_branch
      %9 = sbr.rel target = $region3
    $region8: #{tpu_custom_call.1} parent=1 // loop_exit
      _
    %439 = vsyncpa [#allocation3], 1
    %s440 = scalar_lea.sflag [#allocation3], 1
    %441 = vsyncpa %s440, 1

</llo_original>
